<compile_context>
chip_gen: v6e
topology: v6e:2x2x1
jax: 0.10.0
libtpu: 0.0.40
codegen_flags: <defaults>
</compile_context>

<pallas_src>
import functools

import numpy as np
import jax
import jax.numpy as jnp
from jax import lax
from jax.experimental import pallas as pl
from jax.experimental.pallas import tpu as pltpu


# ----------------------------------------------------------------------------
# VMEM budget: 3/4 of physical, capped at 64 MiB (48 MiB on v7x's 64 MiB VMEM).
# ----------------------------------------------------------------------------
def _compute_vmem_limit():
    cap = 128 * 1024 * 1024
    try:
        cap = int(getattr(pltpu.get_tpu_info(), "vmem_capacity_bytes", cap))
    except Exception:
        pass
    return int(min(cap * 3 // 4, 64 * 1024 * 1024))


_VMEM_LIMIT = _compute_vmem_limit()


def _cparams(*sem):
    return pltpu.CompilerParams(dimension_semantics=sem,
                                vmem_limit_bytes=_VMEM_LIMIT)


# ----------------------------------------------------------------------------
# Tile-size helpers: largest candidate that divides the dim, else full dim.
# (Full-dim blocks always satisfy the (8,128) rule.)
# ----------------------------------------------------------------------------
def _pick(dim, candidates):
    for c in candidates:
        if c <= dim and dim % c == 0:
            return c
    return dim


def _tile_rows(m):
    return _pick(m, (512, 256, 128, 64, 32, 16, 8))


def _tile_q(s):
    return _pick(s, (256, 128, 64, 32, 16, 8))


def _split_rows(rows):
    """Row tile + 2-way 'parallel' split for the scalar-output loss kernels."""
    tm = _tile_rows(rows)
    if (rows // tm) % 2 == 1 and tm % 16 == 0:
        tm //= 2                       # make the step count even when cheap
    steps = rows // tm
    ncores = 2 if steps % 2 == 0 else 1
    return tm, ncores, steps // ncores


# ----------------------------------------------------------------------------
# Kernel: y = x @ W + b (optional gelu/relu) -- weight fully VMEM-resident,
# grid over row tiles only.
# ----------------------------------------------------------------------------
def _linear_kernel(x_ref, w_ref, b_ref, o_ref, *, activation):
    y = jnp.dot(x_ref[...], w_ref[...], preferred_element_type=jnp.float32)
    y = y + b_ref[...]
    if activation == "relu":
        y = jnp.maximum(y, 0.0)
    elif activation == "gelu":
        # TODO(synk): HF BERT uses exact erf GELU; tanh approximation kept here.
        y = jax.nn.gelu(y, approximate=True)
    o_ref[...] = y.astype(o_ref.dtype)


def linear(x, w, b, activation=None, out_dtype=jnp.bfloat16):
    rows, K = x.shape
    N = w.shape[1]
    tm = _tile_rows(rows)
    return pl.pallas_call(
        functools.partial(_linear_kernel, activation=activation),
        out_shape=jax.ShapeDtypeStruct((rows, N), out_dtype),
        grid=(rows // tm,),
        in_specs=[pl.BlockSpec((tm, K), lambda i: (i, 0)),
                  pl.BlockSpec((K, N), lambda i: (0, 0)),      # resident weight
                  pl.BlockSpec((1, N), lambda i: (0, 0))],
        out_specs=pl.BlockSpec((tm, N), lambda i: (i, 0)),
        compiler_params=_cparams("parallel"),
    )(x, w, b.reshape(1, N).astype(jnp.float32))


# ----------------------------------------------------------------------------
# Kernel: fused QKV projection -> three separate lane-dense outputs.
# (Q weights/bias carry the 1/sqrt(dh) attention scale, baked at init.)
# ----------------------------------------------------------------------------
def _qkv_kernel(x_ref, w_ref, b_ref, q_ref, k_ref, v_ref, *, hidden):
    y = jnp.dot(x_ref[...], w_ref[...], preferred_element_type=jnp.float32)
    y = y + b_ref[...]
    q_ref[...] = y[:, :hidden].astype(q_ref.dtype)
    k_ref[...] = y[:, hidden:2 * hidden].astype(k_ref.dtype)
    v_ref[...] = y[:, 2 * hidden:].astype(v_ref.dtype)


def qkv_projection(x, w_qkv, b_qkv):
    rows, H = x.shape
    threeH = w_qkv.shape[1]
    tm = _tile_rows(rows)
    shp = jax.ShapeDtypeStruct((rows, H), jnp.bfloat16)
    return pl.pallas_call(
        functools.partial(_qkv_kernel, hidden=H),
        out_shape=(shp, shp, shp),
        grid=(rows // tm,),
        in_specs=[pl.BlockSpec((tm, H), lambda i: (i, 0)),
                  pl.BlockSpec((H, threeH), lambda i: (0, 0)),
                  pl.BlockSpec((1, threeH), lambda i: (0, 0))],
        out_specs=(pl.BlockSpec((tm, H), lambda i: (i, 0)),) * 3,
        compiler_params=_cparams("parallel"),
    )(x, w_qkv, b_qkv.reshape(1, threeH).astype(jnp.float32))


# ----------------------------------------------------------------------------
# Kernel: y = LayerNorm(residual + x @ W + b) -- resident weight, row grid.
# ----------------------------------------------------------------------------
def _matmul_res_ln_kernel(x_ref, w_ref, b_ref, res_ref, g_ref, beta_ref,
                          o_ref, *, eps):
    y = jnp.dot(x_ref[...], w_ref[...], preferred_element_type=jnp.float32)
    y = y + b_ref[...] + res_ref[...].astype(jnp.float32)
    mu = jnp.mean(y, axis=-1, keepdims=True)
    var = jnp.mean((y - mu) ** 2, axis=-1, keepdims=True)
    o_ref[...] = ((y - mu) * lax.rsqrt(var + eps) * g_ref[...]
                  + beta_ref[...]).astype(o_ref.dtype)


def matmul_residual_layernorm(x, w, b, residual, gamma, beta, eps=1e-12):
    rows, K = x.shape
    N = w.shape[1]
    tm = _tile_rows(rows)
    return pl.pallas_call(
        functools.partial(_matmul_res_ln_kernel, eps=eps),
        out_shape=jax.ShapeDtypeStruct((rows, N), jnp.bfloat16),
        grid=(rows // tm,),
        in_specs=[pl.BlockSpec((tm, K), lambda i: (i, 0)),
                  pl.BlockSpec((K, N), lambda i: (0, 0)),
                  pl.BlockSpec((1, N), lambda i: (0, 0)),
                  pl.BlockSpec((tm, N), lambda i: (i, 0)),
                  pl.BlockSpec((1, N), lambda i: (0, 0)),
                  pl.BlockSpec((1, N), lambda i: (0, 0))],
        out_specs=pl.BlockSpec((tm, N), lambda i: (i, 0)),
        compiler_params=_cparams("parallel"),
    )(x, w, b.reshape(1, N).astype(jnp.float32), residual,
      gamma.reshape(1, N).astype(jnp.float32),
      beta.reshape(1, N).astype(jnp.float32))


# ----------------------------------------------------------------------------
# Kernel: row-tiled LayerNorm (embedding LN only).
# ----------------------------------------------------------------------------
def _layernorm_kernel(x_ref, g_ref, b_ref, o_ref, *, eps):
    x = x_ref[...].astype(jnp.float32)
    mu = jnp.mean(x, axis=-1, keepdims=True)
    var = jnp.mean((x - mu) ** 2, axis=-1, keepdims=True)
    o_ref[...] = ((x - mu) * lax.rsqrt(var + eps) * g_ref[...]
                  + b_ref[...]).astype(o_ref.dtype)


def layernorm(x, g, b, eps=1e-12, out_dtype=jnp.bfloat16):
    rows, H = x.shape
    tm = _tile_rows(rows)
    return pl.pallas_call(
        functools.partial(_layernorm_kernel, eps=eps),
        out_shape=jax.ShapeDtypeStruct((rows, H), out_dtype),
        grid=(rows // tm,),
        in_specs=[pl.BlockSpec((tm, H), lambda i: (i, 0)),
                  pl.BlockSpec((1, H), lambda i: (0, 0)),
                  pl.BlockSpec((1, H), lambda i: (0, 0))],
        out_specs=pl.BlockSpec((tm, H), lambda i: (i, 0)),
        compiler_params=_cparams("parallel"),
    )(x, g.reshape(1, H).astype(jnp.float32),
      b.reshape(1, H).astype(jnp.float32))


# ----------------------------------------------------------------------------
# Kernel: self-attention. Grid = (batch, query-tile), both parallel.
# Scale baked in Q weights; no k.T transpose; per-head writes (no concat).
# ----------------------------------------------------------------------------
def _attention_kernel(mask_ref, q_ref, k_ref, v_ref, o_ref, *, heads, dh):
    bias = (1.0 - mask_ref[0].astype(jnp.float32)) * (-10000.0)   # [1, S]
    # TODO(synk): flash-style KV tiling (online softmax) for S >= 512.
    for h in range(heads):
        qh = q_ref[0, :, h * dh:(h + 1) * dh]                     # [tq, dh] bf16
        kh = k_ref[0, :, h * dh:(h + 1) * dh]                     # [S,  dh] bf16
        vh = v_ref[0, :, h * dh:(h + 1) * dh]                     # [S,  dh] bf16
        s = lax.dot_general(qh, kh, (((1,), (1,)), ((), ())),
                            preferred_element_type=jnp.float32)   # [tq, S]
        s = s + bias
        s = s - jnp.max(s, axis=-1, keepdims=True)
        p = jnp.exp(s)
        inv = pl.reciprocal(jnp.sum(p, axis=-1, keepdims=True), approx=True)
        ctx = jnp.dot((p * inv).astype(jnp.bfloat16), vh,
                      preferred_element_type=jnp.float32)
        o_ref[0, :, h * dh:(h + 1) * dh] = ctx.astype(o_ref.dtype)


def attention(q3, k3, v3, mask3d, heads, dh):
    B, S, H = q3.shape
    tq = _tile_q(S)
    return pl.pallas_call(
        functools.partial(_attention_kernel, heads=heads, dh=dh),
        out_shape=jax.ShapeDtypeStruct((B, S, H), jnp.bfloat16),
        grid=(B, S // tq),
        in_specs=[pl.BlockSpec((1, 1, S), lambda b, qi: (b, 0, 0)),
                  pl.BlockSpec((1, tq, H), lambda b, qi: (b, qi, 0)),
                  pl.BlockSpec((1, S, H), lambda b, qi: (b, 0, 0)),
                  pl.BlockSpec((1, S, H), lambda b, qi: (b, 0, 0))],
        out_specs=pl.BlockSpec((1, tq, H), lambda b, qi: (b, qi, 0)),
        compiler_params=_cparams("parallel", "parallel"),
    )(mask3d, q3, k3, v3)


# ----------------------------------------------------------------------------
# Kernel: fused ha/hc encoders (shared row tile), separate ha / hc outputs.
# ----------------------------------------------------------------------------
def _ha_hc_kernel(x_ref, w1a_ref, b1a_ref, w2a_ref, b2a_ref,
                  w1c_ref, b1c_ref, w2c_ref, b2c_ref, ha_ref, hc_ref):
    x = x_ref[...]
    ta = jnp.maximum(jnp.dot(x, w1a_ref[...],
                             preferred_element_type=jnp.float32) + b1a_ref[...], 0.0)
    ha_ref[...] = (jnp.dot(ta.astype(jnp.bfloat16), w2a_ref[...],
                           preferred_element_type=jnp.float32)
                   + b2a_ref[...]).astype(ha_ref.dtype)
    tc = jnp.maximum(jnp.dot(x, w1c_ref[...],
                             preferred_element_type=jnp.float32) + b1c_ref[...], 0.0)
    hc_ref[...] = (jnp.dot(tc.astype(jnp.bfloat16), w2c_ref[...],
                           preferred_element_type=jnp.float32)
                   + b2c_ref[...]).astype(hc_ref.dtype)


def ha_hc_encode(x, enc):
    w1a, b1a, w2a, b2a, w1c, b1c, w2c, b2c = enc
    rows, H = x.shape
    hd = w2a.shape[1]
    tm = _tile_rows(rows)
    full = lambda shape: pl.BlockSpec(shape, lambda i: (0, 0))
    return pl.pallas_call(
        _ha_hc_kernel,
        out_shape=(jax.ShapeDtypeStruct((rows, hd), jnp.bfloat16),) * 2,
        grid=(rows // tm,),
        in_specs=[pl.BlockSpec((tm, H), lambda i: (i, 0)),
                  full((H, H)), full((1, H)), full((H, hd)), full((1, hd)),
                  full((H, H)), full((1, H)), full((H, hd)), full((1, hd))],
        out_specs=(pl.BlockSpec((tm, hd), lambda i: (i, 0)),) * 2,
        compiler_params=_cparams("parallel"),
    )(x, w1a, b1a.reshape(1, H).astype(jnp.float32),
      w2a, b2a.reshape(1, hd).astype(jnp.float32),
      w1c, b1c.reshape(1, H).astype(jnp.float32),
      w2c, b2c.reshape(1, hd).astype(jnp.float32))


# ----------------------------------------------------------------------------
# Kernel: decoder MLP fused with masked reconstruction SSE. Scalar-only output;
# decoded activations never hit HBM. SSE accumulated element-wise in VMEM
# scratch; single reduce in the pl.when(last) finalize. 2-way parallel split.
# ----------------------------------------------------------------------------
def _decoder_sse_kernel(ha_ref, hc_ref, w1a_ref, w1c_ref, b1_ref, w2_ref, b2_ref,
                        tgt_ref, m_ref, o_ref, acc_ref):
    i = pl.program_id(1)

    @pl.when(i == 0)
    def _():
        acc_ref[...] = jnp.zeros_like(acc_ref)

    h = (jnp.dot(ha_ref[...], w1a_ref[...], preferred_element_type=jnp.float32)
         + jnp.dot(hc_ref[...], w1c_ref[...], preferred_element_type=jnp.float32)
         + b1_ref[...])
    h = jnp.maximum(h, 0.0)
    y = (jnp.dot(h.astype(jnp.bfloat16), w2_ref[...],
                 preferred_element_type=jnp.float32) + b2_ref[...])
    # TODO(synk): target is the bf16-stored seq activations (bf16 rounding vs
    # the f32 PyTorch reference target).
    diff = (y - tgt_ref[...].astype(jnp.float32)) * m_ref[...]
    acc_ref[...] += diff * diff                       # VPU-only per step

    @pl.when(i == pl.num_programs(1) - 1)
    def _():
        o_ref[...] = jnp.sum(acc_ref[...], keepdims=True)   # one XLU reduce


def decoder_masked_sse(ha, hc, dec, target, mask):
    w1a, w1c, b1, w2, b2 = dec
    rows, hd = ha.shape
    H = w2.shape[1]
    tm, ncores, spc = _split_rows(rows)
    row = lambda c, i: (c * spc + i, 0)
    full = lambda shape: pl.BlockSpec(shape, lambda c, i: (0, 0))
    out = pl.pallas_call(
        _decoder_sse_kernel,
        out_shape=jax.ShapeDtypeStruct((ncores, 1), jnp.float32),
        grid=(ncores, spc),
        in_specs=[pl.BlockSpec((tm, hd), row),
                  pl.BlockSpec((tm, hd), row),
                  full((hd, H)), full((hd, H)), full((1, H)),
                  full((H, H)), full((1, H)),
                  pl.BlockSpec((tm, H), row),
                  pl.BlockSpec((tm, 1), row)],
        out_specs=pl.BlockSpec((1, 1), lambda c, i: (c, 0)),
        scratch_shapes=[pltpu.VMEM((tm, H), jnp.float32)],
        compiler_params=_cparams("parallel", "arbitrary"),
    )(ha, hc, w1a, w1c, b1.reshape(1, H).astype(jnp.float32),
      w2, b2.reshape(1, H).astype(jnp.float32), target, mask)
    return jnp.sum(out)


# ----------------------------------------------------------------------------
# Kernel: v/a/d heads + VPU 1-wide projections + vad-SSE + orthogonal-SSE.
# Consumes only hc; two scalar outputs; 2-way parallel split; VMEM scratch
# accumulators with a single finalize reduce.
# ----------------------------------------------------------------------------
def _vad_kernel(hc_ref, wvad_ref, bvad_ref, wp_ref, bp_ref, tgt_ref,
                vad_o_ref, ortho_o_ref, acc_vad_ref, acc_ortho_ref, *, h_dim):
    i = pl.program_id(1)

    @pl.when(i == 0)
    def _():
        acc_vad_ref[...] = jnp.zeros_like(acc_vad_ref)
        acc_ortho_ref[...] = jnp.zeros_like(acc_ortho_ref)

    vad = (jnp.dot(hc_ref[...], wvad_ref[...],
                   preferred_element_type=jnp.float32) + bvad_ref[...])   # [tm, 3h]
    v = vad[:, :h_dim]
    a = vad[:, h_dim:2 * h_dim]
    d = vad[:, 2 * h_dim:]

    # 1-wide projections on the VPU: broadcast-mul + per-segment row reduce.
    pw = vad * wp_ref[...]
    tgt = tgt_ref[...]
    dv = (jnp.sum(pw[:, :h_dim], axis=-1, keepdims=True)
          + bp_ref[:, 0:1] - tgt[:, 0:1])
    da = (jnp.sum(pw[:, h_dim:2 * h_dim], axis=-1, keepdims=True)
          + bp_ref[:, 1:2] - tgt[:, 1:2])
    dd = (jnp.sum(pw[:, 2 * h_dim:], axis=-1, keepdims=True)
          + bp_ref[:, 2:3] - tgt[:, 2:3])
    acc_vad_ref[...] += dv * dv + da * da + dd * dd

    # ||stack([v,a,d]) stack([v,a,d])^T - I||_F^2 per token (Gram is symmetric).
    gvv = jnp.sum(v * v, axis=-1, keepdims=True)
    gaa = jnp.sum(a * a, axis=-1, keepdims=True)
    gdd = jnp.sum(d * d, axis=-1, keepdims=True)
    gva = jnp.sum(v * a, axis=-1, keepdims=True)
    gvd = jnp.sum(v * d, axis=-1, keepdims=True)
    gad = jnp.sum(a * d, axis=-1, keepdims=True)
    acc_ortho_ref[...] += ((gvv - 1.0) ** 2 + (gaa - 1.0) ** 2 + (gdd - 1.0) ** 2
                           + 2.0 * (gva ** 2 + gvd ** 2 + gad ** 2))

    @pl.when(i == pl.num_programs(1) - 1)
    def _():
        vad_o_ref[...] = jnp.sum(acc_vad_ref[...], keepdims=True)
        ortho_o_ref[...] = jnp.sum(acc_ortho_ref[...], keepdims=True)


def vad_heads_losses(hc, vad_params, target):
    w_vad, b_vad, w_proj_row, b_proj = vad_params
    rows, h_dim = hc.shape
    tm, ncores, spc = _split_rows(rows)
    row = lambda c, i: (c * spc + i, 0)
    full = lambda shape: pl.BlockSpec(shape, lambda c, i: (0, 0))
    vad_sse, ortho_sse = pl.pallas_call(
        functools.partial(_vad_kernel, h_dim=h_dim),
        out_shape=(jax.ShapeDtypeStruct((ncores, 1), jnp.float32),) * 2,
        grid=(ncores, spc),
        in_specs=[pl.BlockSpec((tm, h_dim), row),
                  full((h_dim, 3 * h_dim)), full((1, 3 * h_dim)),
                  full((1, 3 * h_dim)), full((1, 3)),
                  pl.BlockSpec((tm, 3), row)],
        out_specs=(pl.BlockSpec((1, 1), lambda c, i: (c, 0)),) * 2,
        scratch_shapes=[pltpu.VMEM((tm, 1), jnp.float32),
                        pltpu.VMEM((tm, 1), jnp.float32)],
        compiler_params=_cparams("parallel", "arbitrary"),
    )(hc, w_vad, b_vad.reshape(1, -1).astype(jnp.float32),
      w_proj_row, b_proj.reshape(1, 3).astype(jnp.float32), target)
    return jnp.sum(vad_sse), jnp.sum(ortho_sse)


# ----------------------------------------------------------------------------
# Deterministic parameter init (random BERT stand-in; bf16 weight prep).
# ----------------------------------------------------------------------------
def _dense(key, fan_in, fan_out):
    w = 0.02 * jax.random.normal(key, (fan_in, fan_out), jnp.float32)
    b = jnp.zeros((fan_out,), jnp.float32)
    return w, b


def init_bert(key, vocab, max_pos, H, heads, inter, n_layers):
    keys = jax.random.split(key, 3 + 6 * n_layers)
    it = iter(keys)
    dh = H // heads
    scale = 1.0 / float(np.sqrt(dh))
    p = {
        "num_heads": heads,
        "word_emb": 0.02 * jax.random.normal(next(it), (vocab, H), jnp.float32),
        "pos_emb": 0.02 * jax.random.normal(next(it), (max_pos, H), jnp.float32),
        "type_emb": 0.02 * jax.random.normal(next(it), (2, H), jnp.float32),
        "emb_ln_g": jnp.ones((H,), jnp.float32),
        "emb_ln_b": jnp.zeros((H,), jnp.float32),
        "layers": [],
    }
    for _ in range(n_layers):
        wq, bq = _dense(next(it), H, H)
        wk, bk = _dense(next(it), H, H)
        wv, bv = _dense(next(it), H, H)
        wo, bo = _dense(next(it), H, H)
        w1, b1 = _dense(next(it), H, inter)
        w2, b2 = _dense(next(it), inter, H)
        # Bake the 1/sqrt(dh) attention scale into the Q projection.
        wq, bq = wq * scale, bq * scale
        p["layers"].append({
            "w_qkv": jnp.concatenate([wq, wk, wv], axis=1).astype(jnp.bfloat16),
            "b_qkv": jnp.concatenate([bq, bk, bv], axis=0),
            "wo": wo.astype(jnp.bfloat16), "bo": bo,
            "ln1_g": jnp.ones((H,), jnp.float32),
            "ln1_b": jnp.zeros((H,), jnp.float32),
            "w1": w1.astype(jnp.bfloat16), "b1": b1,
            "w2": w2.astype(jnp.bfloat16), "b2": b2,
            "ln2_g": jnp.ones((H,), jnp.float32),
            "ln2_b": jnp.zeros((H,), jnp.float32),
        })
    return p


def init_model(key, H, h_dim, vocab, max_pos, heads, inter, n_layers):
    k = jax.random.split(key, 16)
    params = {"bert": init_bert(k[0], vocab, max_pos, H, heads, inter, n_layers)}

    # ha / hc encoders: shared row tile, no zero-padded block-diagonal weights.
    w1a, b1a = _dense(k[1], H, H)
    w2a, b2a = _dense(k[2], H, h_dim)
    w1c, b1c = _dense(k[3], H, H)
    w2c, b2c = _dense(k[4], H, h_dim)
    params["ha_hc_encoder"] = (w1a.astype(jnp.bfloat16), b1a,
                               w2a.astype(jnp.bfloat16), b2a,
                               w1c.astype(jnp.bfloat16), b1c,
                               w2c.astype(jnp.bfloat16), b2c)

    # Decoder Linear(2h, H) split into its ha / hc halves (no concat needed).
    wd1, bd1 = _dense(k[5], 2 * h_dim, H)
    wd2, bd2 = _dense(k[6], H, H)
    params["decoder"] = (wd1[:h_dim].astype(jnp.bfloat16),
                         wd1[h_dim:].astype(jnp.bfloat16), bd1,
                         wd2.astype(jnp.bfloat16), bd2)

    # v/a/d layers fused [h, 3h]; 1-wide projections kept as a VPU row [1, 3h].
    wv, bv = _dense(k[7], h_dim, h_dim)
    wa, ba = _dense(k[8], h_dim, h_dim)
    wd_, bd_ = _dense(k[9], h_dim, h_dim)
    w_vad = jnp.concatenate([wv, wa, wd_], axis=1).astype(jnp.bfloat16)
    b_vad = jnp.concatenate([bv, ba, bd_], axis=0)
    wpv, bpv = _dense(k[10], h_dim, 1)
    wpa, bpa = _dense(k[11], h_dim, 1)
    wpd, bpd = _dense(k[12], h_dim, 1)
    w_proj_row = jnp.concatenate([wpv[:, 0], wpa[:, 0], wpd[:, 0]],
                                 axis=0).reshape(1, 3 * h_dim)
    b_proj = jnp.concatenate([bpv, bpa, bpd], axis=0)
    params["vad"] = (w_vad, b_vad, w_proj_row, b_proj)
    return params


# ----------------------------------------------------------------------------
# BERT stand-in forward (deterministic random weights).
# ----------------------------------------------------------------------------
def bert_forward(p, input_ids, token_type_ids, attention_mask):
    B, S = input_ids.shape
    H = p["emb_ln_g"].shape[0]
    heads = p["num_heads"]
    dh = H // heads

    emb = (jnp.take(p["word_emb"], input_ids, axis=0)
           + p["pos_emb"][None, :S, :]
           + jnp.take(p["type_emb"], token_type_ids, axis=0))
    x2d = layernorm(emb.reshape(B * S, H), p["emb_ln_g"], p["emb_ln_b"])  # bf16

    mask3d = attention_mask.reshape(B, 1, S).astype(jnp.float32)

    for layer in p["layers"]:
        q2d, k2d, v2d = qkv_projection(x2d, layer["w_qkv"], layer["b_qkv"])
        ctx = attention(q2d.reshape(B, S, H), k2d.reshape(B, S, H),
                        v2d.reshape(B, S, H), mask3d, heads, dh)
        x2d = matmul_residual_layernorm(ctx.reshape(B * S, H),
                                        layer["wo"], layer["bo"],
                                        x2d, layer["ln1_g"], layer["ln1_b"])
        ffn = linear(x2d, layer["w1"], layer["b1"], activation="gelu")
        x2d = matmul_residual_layernorm(ffn, layer["w2"], layer["b2"],
                                        x2d, layer["ln2_g"], layer["ln2_b"])
    return x2d.reshape(B, S, H)


# ----------------------------------------------------------------------------
# FDGRPretrainedModel.forward
# ----------------------------------------------------------------------------
def fdgr_forward(params, original, contrast=None, training=False):
    if not training:
        seq = bert_forward(params["bert"], original["input_ids"],
                           original["token_type_ids"], original["attention_mask"])
        B, S, H = seq.shape
        ha2d, hc2d = ha_hc_encode(seq.reshape(B * S, H), params["ha_hc_encoder"])
        hd = ha2d.shape[1]
        return {"loss": None,
                "hidden_states": (ha2d.astype(jnp.float32).reshape(B, S, hd),
                                  hc2d.astype(jnp.float32).reshape(B, S, hd),
                                  seq.astype(jnp.float32))}

    # NOTE: the reference's host-blocking attention-mask equality assert is
    # omitted (it forces a device->host sync and serializes dispatch).
    input_ids = jnp.concatenate([original["input_ids"], contrast["input_ids"]], 0)
    token_type_ids = jnp.concatenate([original["token_type_ids"],
                                      contrast["token_type_ids"]], 0)
    attention_mask = jnp.concatenate([original["attention_mask"],
                                      contrast["attention_mask"]], 0)

    seq = bert_forward(params["bert"], input_ids, token_type_ids, attention_mask)
    B2, S, H = seq.shape
    seq2d = seq.reshape(B2 * S, H)

    ha2d, hc2d = ha_hc_encode(seq2d, params["ha_hc_encoder"])
    hd = ha2d.shape[1]

    # TODO(synk): club_loss (vCLUB.update) -- vCLUB class not provided in the reference.
    club_loss = None
    # TODO(synk): ha_loss (InfoNCE.learning_loss + token-match mask) -- InfoNCE not provided.
    ha_loss = None

    mask2d = attention_mask.reshape(B2 * S, 1).astype(jnp.float32)
    count = jnp.sum(mask2d)
    recon_sse = decoder_masked_sse(ha2d, hc2d, params["decoder"], seq2d, mask2d)
    reconstruct_loss = recon_sse / (count * H)

    vad_tgt = jnp.concatenate([original["vad_ids"], contrast["vad_ids"]],
                              0).reshape(B2 * S, 3).astype(jnp.float32)
    vad_sse, ortho_sse = vad_heads_losses(hc2d, params["vad"], vad_tgt)
    vad_loss = vad_sse / (B2 * S * 3)
    orthogonal_loss = jnp.sqrt(ortho_sse)

    return {"loss": {"club_loss": club_loss,
                     "reconstruct_loss": reconstruct_loss,
                     "orthogonal_loss": orthogonal_loss,
                     "ha_loss": ha_loss,
                     "vad_loss": vad_loss},
            "hidden_states": (ha2d.astype(jnp.float32).reshape(B2, S, hd),
                              hc2d.astype(jnp.float32).reshape(B2, S, hd),
                              seq.astype(jnp.float32))}


# ----------------------------------------------------------------------------
if __name__ == "__main__":
    B, S, H, h_dim = 2, 8, 32, 16
    vocab, max_pos, heads, inter, n_layers = 50, 16, 2, 64, 2

    key = jax.random.PRNGKey(0)
    pkey, ikey = jax.random.split(key)
    params = init_model(pkey, H, h_dim, vocab, max_pos, heads, inter, n_layers)

    k1, k2, k3, k4 = jax.random.split(ikey, 4)
    attn_mask = jnp.concatenate(
        [jnp.ones((1, S), jnp.int32),
         jnp.concatenate([jnp.ones((1, S - 2), jnp.int32),
                          jnp.zeros((1, 2), jnp.int32)], 1)], 0)

    original = {
        "input_ids": jax.random.randint(k1, (B, S), 0, vocab, dtype=jnp.int32),
        "token_type_ids": jnp.zeros((B, S), jnp.int32),
        "attention_mask": attn_mask,
        "vad_ids": jax.random.uniform(k3, (B, S, 3), jnp.float32),
    }
    contrast = {
        "input_ids": jax.random.randint(k2, (B, S), 0, vocab, dtype=jnp.int32),
        "token_type_ids": jnp.zeros((B, S), jnp.int32),
        "attention_mask": attn_mask,
        "vad_ids": jax.random.uniform(k4, (B, S, 3), jnp.float32),
    }

    train_out = fdgr_forward(params, original, contrast, training=True)
    eval_out = fdgr_forward(params, original, training=False)

    jax.block_until_ready((train_out["loss"], train_out["hidden_states"],
                           eval_out["hidden_states"]))
    print("KERNEL_OK")
</pallas_src>

<mosaic_0001>
module attributes {stable_mosaic.version = 11 : i64} {
  func.func @_layernorm_kernel(%arg0: i32, %arg1: memref<32x32xf32, #tpu.memory_space<vmem>>, %arg2: memref<1x32xf32, #tpu.memory_space<vmem>>, %arg3: memref<1x32xf32, #tpu.memory_space<vmem>>, %arg4: memref<32x32xbf16, #tpu.memory_space<vmem>>) attributes {dimension_semantics = [#tpu.dimension_semantics<parallel>], iteration_bounds = array<i64: 1>, scalar_prefetch = 0 : i64, scratch_operands = 0 : i64, tpu.core_type = #tpu.core_type<tc>, window_params = [{transform_indices = @transform_0, window_bounds = array<i64: 32, 32>}, {pipeline_mode = #tpu.pipeline_mode<synchronous>, transform_indices = @transform_1, window_bounds = array<i64: 1, 32>}, {pipeline_mode = #tpu.pipeline_mode<synchronous>, transform_indices = @transform_2, window_bounds = array<i64: 1, 32>}, {transform_indices = @transform_3, window_bounds = array<i64: 32, 32>}]} {
    %c0 = arith.constant 0 : index
    %c0_0 = arith.constant 0 : index
    %0 = vector.load %arg1[%c0, %c0_0] : memref<32x32xf32, #tpu.memory_space<vmem>>, vector<32x32xf32>
    %cst = arith.constant dense<0.000000e+00> : vector<32xf32>
    %1 = vector.multi_reduction <add>, %0, %cst [1] : vector<32x32xf32> to vector<32xf32>
    %2 = vector.shape_cast %1 : vector<32xf32> to vector<32x1xf32>
    %cst_1 = arith.constant 3.200000e+01 : f32
    %3 = vector.broadcast %cst_1 : f32 to vector<32x1xf32>
    %4 = arith.divf %2, %3 : vector<32x1xf32>
    %5 = vector.broadcast %4 : vector<32x1xf32> to vector<32x32xf32>
    %6 = arith.subf %0, %5 : vector<32x32xf32>
    %7 = arith.mulf %6, %6 : vector<32x32xf32>
    %cst_2 = arith.constant dense<0.000000e+00> : vector<32xf32>
    %8 = vector.multi_reduction <add>, %7, %cst_2 [1] : vector<32x32xf32> to vector<32xf32>
    %9 = vector.shape_cast %8 : vector<32xf32> to vector<32x1xf32>
    %cst_3 = arith.constant 3.200000e+01 : f32
    %10 = vector.broadcast %cst_3 : f32 to vector<32x1xf32>
    %11 = arith.divf %9, %10 : vector<32x1xf32>
    %12 = vector.broadcast %4 : vector<32x1xf32> to vector<32x32xf32>
    %13 = arith.subf %0, %12 : vector<32x32xf32>
    %cst_4 = arith.constant 9.99999996E-13 : f32
    %14 = vector.broadcast %cst_4 : f32 to vector<32x1xf32>
    %15 = arith.addf %11, %14 : vector<32x1xf32>
    %16 = math.rsqrt %15 : vector<32x1xf32>
    %17 = vector.broadcast %16 : vector<32x1xf32> to vector<32x32xf32>
    %18 = arith.mulf %13, %17 : vector<32x32xf32>
    %c0_5 = arith.constant 0 : index
    %c0_6 = arith.constant 0 : index
    %19 = vector.load %arg2[%c0_5, %c0_6] : memref<1x32xf32, #tpu.memory_space<vmem>>, vector<1x32xf32>
    %20 = vector.broadcast %19 : vector<1x32xf32> to vector<32x32xf32>
    %21 = arith.mulf %18, %20 : vector<32x32xf32>
    %c0_7 = arith.constant 0 : index
    %c0_8 = arith.constant 0 : index
    %22 = vector.load %arg3[%c0_7, %c0_8] : memref<1x32xf32, #tpu.memory_space<vmem>>, vector<1x32xf32>
    %23 = vector.broadcast %22 : vector<1x32xf32> to vector<32x32xf32>
    %24 = arith.addf %21, %23 : vector<32x32xf32>
    %25 = arith.truncf %24 : vector<32x32xf32> to vector<32x32xbf16>
    %c0_9 = arith.constant 0 : index
    %c0_10 = arith.constant 0 : index
    %26 = vector.load %arg4[%c0_9, %c0_10] : memref<32x32xbf16, #tpu.memory_space<vmem>>, vector<32x32xbf16>
    tpu.vector_store %arg4[%c0_9, %c0_10], %25 {strides = array<i32>} : memref<32x32xbf16, #tpu.memory_space<vmem>>, vector<32x32xbf16>,
    return
  }
  func.func @transform_0(%arg0: i32) -> (i32, i32) {
    %c0_i32 = arith.constant 0 : i32
    %c0_i32_0 = arith.constant 0 : i32
    return %arg0, %c0_i32 : i32, i32
  }
  func.func @transform_1(%arg0: i32) -> (i32, i32) {
    %c0_i32 = arith.constant 0 : i32
    %c0_i32_0 = arith.constant 0 : i32
    %c0_i32_1 = arith.constant 0 : i32
    return %c0_i32, %c0_i32_0 : i32, i32
  }
  func.func @transform_2(%arg0: i32) -> (i32, i32) {
    %c0_i32 = arith.constant 0 : i32
    %c0_i32_0 = arith.constant 0 : i32
    %c0_i32_1 = arith.constant 0 : i32
    return %c0_i32, %c0_i32_0 : i32, i32
  }
  func.func @transform_3(%arg0: i32) -> (i32, i32) {
    %c0_i32 = arith.constant 0 : i32
    %c0_i32_0 = arith.constant 0 : i32
    return %arg0, %c0_i32 : i32, i32
  }
}

</mosaic_0001>

<llo_original>
// kernel: tpu_custom_call.1
$region0: #{tpu_custom_call.1}
  #allocation0 [shape = 'u32[]', space=smem, size = 0x4, offset = 0x4, fixed_abs, tag = 'smem constant byte address 0x4 - core index']
  #allocation1 [shape = 'u32[144,128]{1,0:T(1,128)}', space=vmem, size = 0x12000, scoped, tag = 'internal scratch']
  %s0 = inlined_call_operand.hbm [shape: f32[32,32], index: 0, kind: input, shape index: {}]
  %s1 = inlined_call_operand.vmem [shape: f32[1,32], index: 1, kind: input, shape index: {}]
  %s2 = inlined_call_operand.vmem [shape: f32[1,32], index: 2, kind: input, shape index: {}]
  %s3 = inlined_call_operand.hbm [shape: bf16[32,32], index: 3, kind: output, shape index: {}]
  %s4 = sld [smem:[#allocation0]]
  $region26: #{tpu_custom_call.1} parent=0
    _
  %s6 = ssub.s32 1, %s4
  %s7 = scalar_select 0, %s6, %s4
  $region1: #{tpu_custom_call.1} parent=0
    #allocation2 [shape = 'u8[16384]{0}', space=vmem, size = 0x4000, scoped, tag = 'input window, operand 0, single buffered']
    #allocation3 [shape = 's32[1]{0}', space=sflag, size = 0x4, scoped, tag = 'scoped memory for tpu_custom_call.1']
    #allocation4 [shape = 's32[1]{0}', space=sflag, size = 0x4, scoped, tag = 'scoped memory for tpu_custom_call.1']
    #allocation5 [shape = 'u8[8192]{0}', space=vmem, size = 0x2000, scoped, tag = 'output window, operand 0, single buffered']
    %8 = vsyncpa [#allocation3], 0
    %9 = vsyncpa [#allocation4], 0
    // Predicated region
    $region2: #{tpu_custom_call.1} parent=1 // pred_check
      _
    $region3: #{tpu_custom_call.1} parent=1 // pred_check_branch
      %11 = sbr.rel (0) target = $region5
    $region4: #{tpu_custom_call.1} parent=1 // pred_region
      %s13 = ssub.s32 512, 512
      %14 = vsyncadd [#allocation3], %s13
      %s15 = sshll.u32 [#allocation2], 4
      %s16 = int_to_ptr.vmem [resolvable:$true] %s15
      %21 = dma.hbm_to_vmem [thread:$0]  %s0, 512, %s16, [#allocation3], 128, 128, 8
    $region5: #{tpu_custom_call.1} parent=1 // pred_fallthru
      _
    // Predicated region
    $region6: #{tpu_custom_call.1} parent=1 // pred_check
      _
    $region7: #{tpu_custom_call.1} parent=1 // pred_check_branch
      %23 = sbr.rel (0) target = $region9
    $region8: #{tpu_custom_call.1} parent=1 // pred_region
      _
    $region9: #{tpu_custom_call.1} parent=1 // pred_fallthru
      _
    // Predicated region
    $region10: #{tpu_custom_call.1} parent=1 // pred_check
      _
    $region11: #{tpu_custom_call.1} parent=1 // pred_check_branch
      %25 = sbr.rel (0) target = $region13
    $region12: #{tpu_custom_call.1} parent=1 // pred_region
      _
    $region13: #{tpu_custom_call.1} parent=1 // pred_fallthru
      _
    // Predicated region
    $region14: #{tpu_custom_call.1} parent=1 // pred_check
      _
    $region15: #{tpu_custom_call.1} parent=1 // pred_check_branch
      %27 = sbr.rel (0) target = $region17
    $region16: #{tpu_custom_call.1} parent=1 // pred_region
      %28 = dma.done [#allocation3], 512
    $region17: #{tpu_custom_call.1} parent=1 // pred_fallthru
      _
    %v29 = vld [vmem:[#allocation2] sm:$0xff]
    %v30 = vld [vmem:[#allocation2 + $0x8] sm:$0xff]
    %v31 = vld [vmem:[#allocation2 + $0x10] sm:$0xff]
    %v32 = vld [vmem:[#allocation2 + $0x18] sm:$0xff]
    %vm33 = vcmask 261120
    %v34 = vsel %vm33, %v29, 0.0
    %35 = vadd.xlane.f32.xlu0 %v34
    %v36 = vpop.xlane.xlu0 %35
    %v37 = vsel %vm33, %v30, 0.0
    %38 = vadd.xlane.f32.xlu0 %v37
    %v39 = vpop.xlane.xlu0 %38
    %v40 = vsel %vm33, %v31, 0.0
    %41 = vadd.xlane.f32.xlu0 %v40
    %v42 = vpop.xlane.xlu0 %41
    %v43 = vsel %vm33, %v32, 0.0
    %44 = vadd.xlane.f32.xlu0 %v43
    %v45 = vpop.xlane.xlu0 %44
    %v46 = vrcp.pop 32.0
    %v47 = vmul.f32 %v36, %v46
    %v48 = vmul.f32 %v39, %v46
    %v49 = vmul.f32 %v42, %v46
    %v50 = vmul.f32 %v45, %v46
    %v51 = vsub.f32 %v29, %v47
    %v52 = vsub.f32 %v30, %v48
    %v53 = vsub.f32 %v31, %v49
    %v54 = vsub.f32 %v32, %v50
    %v55 = vmul.f32 %v51, %v51
    %v56 = vmul.f32 %v52, %v52
    %v57 = vmul.f32 %v53, %v53
    %v58 = vmul.f32 %v54, %v54
    %v59 = vsel %vm33, %v55, 0.0
    %60 = vadd.xlane.f32.xlu0 %v59
    %v61 = vpop.xlane.xlu0 %60
    %v62 = vsel %vm33, %v56, 0.0
    %63 = vadd.xlane.f32.xlu0 %v62
    %v64 = vpop.xlane.xlu0 %63
    %v65 = vsel %vm33, %v57, 0.0
    %66 = vadd.xlane.f32.xlu0 %v65
    %v67 = vpop.xlane.xlu0 %66
    %v68 = vsel %vm33, %v58, 0.0
    %69 = vadd.xlane.f32.xlu0 %v68
    %v70 = vpop.xlane.xlu0 %69
    %v71 = vmul.f32 %v61, %v46
    %v72 = vmul.f32 %v64, %v46
    %v73 = vmul.f32 %v67, %v46
    %v74 = vmul.f32 %v70, %v46
    %v75 = vadd.f32 %v71, 1e-12
    %v76 = vadd.f32 %v72, 1e-12
    %v77 = vadd.f32 %v73, 1e-12
    %v78 = vadd.f32 %v74, 1e-12
    %v79 = vrsqrt.pop %v75
    %v80 = vrsqrt.pop %v76
    %v81 = vrsqrt.pop %v77
    %v82 = vrsqrt.pop %v78
    %v83 = vmul.f32 %v51, %v79
    %v84 = vmul.f32 %v52, %v80
    %v85 = vmul.f32 %v53, %v81
    %v86 = vmul.f32 %v54, %v82
    %v87 = vld [vmem:[%s1] sm:$0x1]
    %v89 = vlaneseq
    %v90 = vshrl.u32 %v89, 7
    %v91 = vsub.s32 0, %v90
    %v92 = vrot.slane %v87, %v91
    %v94 = vmul.f32 %v83, %v92
    %v95 = vmul.f32 %v84, %v92
    %v96 = vmul.f32 %v85, %v92
    %v97 = vmul.f32 %v86, %v92
    %v98 = vld [vmem:[%s2] sm:$0x1]
    %v100 = vlaneseq
    %v101 = vshrl.u32 %v100, 7
    %v102 = vsub.s32 0, %v101
    %v103 = vrot.slane %v98, %v102
    %v105 = vadd.f32 %v94, %v103
    %v106 = vadd.f32 %v95, %v103
    %v107 = vadd.f32 %v96, %v103
    %v108 = vadd.f32 %v97, %v103
    %v109 = vpack.c.bf16 %v106, %v105
    %v110 = vpack.c.bf16 %v108, %v107
    %v113 = vunpack.c.l.b16 %v109
    %v114 = vunpack.c.h.b16 %v109
    %v115 = vunpack.c.l.b16 %v110
    %v116 = vunpack.c.h.b16 %v110
    %v117 = vpack.c.b16 %v113, %v113
    %v118 = vpack.c.b16 %v114, %v114
    %v119 = vpack.c.b16 %v115, %v115
    %v120 = vpack.c.b16 %v116, %v116
    %vm125 = vcmask 257024
    %126 = vst.msk [vmem:[#allocation5] sm:$0xf] %vm125, %v117
    %127 = vst.msk [vmem:[#allocation5 + $0x4] sm:$0xf] %vm125, %v118
    %128 = vst.msk [vmem:[#allocation5 + $0x8] sm:$0xf] %vm125, %v119
    %129 = vst.msk [vmem:[#allocation5 + $0xc] sm:$0xf] %vm125, %v120
    // Predicated region
    $region18: #{tpu_custom_call.1} parent=1 // pred_check
      _
    $region19: #{tpu_custom_call.1} parent=1 // pred_check_branch
      %131 = sbr.rel (0) target = $region21
    $region20: #{tpu_custom_call.1} parent=1 // pred_region
      %s133 = ssub.s32 256, 256
      %134 = vsyncadd [#allocation4], %s133
      %s135 = sshll.u32 [#allocation5], 4
      %s136 = int_to_ptr.vmem [resolvable:$true] %s135
      %141 = dma.vmem_to_hbm [thread:$0]  %s136, 256, %s3, [#allocation4], 64, 64, 4
    $region21: #{tpu_custom_call.1} parent=1 // pred_fallthru
      _
    // Predicated region
    $region22: #{tpu_custom_call.1} parent=1 // pred_check
      _
    $region23: #{tpu_custom_call.1} parent=1 // pred_check_branch
      %143 = sbr.rel (0) target = $region25
    $region24: #{tpu_custom_call.1} parent=1 // pred_region
      %144 = dma.done [#allocation4], 256
    $region25: #{tpu_custom_call.1} parent=1 // pred_fallthru
      _
    %145 = vsyncpa [#allocation3], 1
    %146 = vsyncpa [#allocation4], 1

</llo_original>
